<compile_context>
chip_gen: v5e
topology: v5e:2x2
jax: 0.10.0
libtpu: 0.0.40
codegen_flags: <defaults>
</compile_context>

<pallas_src>
import functools

import jax
import jax.numpy as jnp
from jax.experimental import pallas as pl
from jax.experimental.pallas import tpu as pltpu


def _round_up(x, m):
    return (x + m - 1) // m * m


def _pick_block_b(B, cap=256):
    """Largest multiple-of-8 divisor of B (<= cap); prefer one that leaves >= 2
    grid steps so the parallel batch axis can shard across v7x's 2 TensorCores."""
    best = None
    for cand in range(min(cap, B), 0, -8):
        if cand % 8 == 0 and B % cand == 0:
            if B // cand >= 2:
                return cand
            if best is None:
                best = cand
    return best if best is not None else B


def _classifier_kernel(emb_ref, w1_ref, b1_ref, w2_ref, b2_ref, out_ref, *, inv_s):
    # emb_ref: (block_b, S, E_pad) bf16 block of gathered embeddings.
    # Mean over seq in f32, then two MXU matmuls with f32 accumulation.
    x = jnp.sum(emb_ref[...].astype(jnp.float32), axis=1) * inv_s           # (block_b, E_pad)
    h = jnp.dot(x, w1_ref[...], preferred_element_type=jnp.float32) + b1_ref[...]
    h = jnp.maximum(h, 0.0)                                                 # ReLU
    o = jnp.dot(h, w2_ref[...], preferred_element_type=jnp.float32) + b2_ref[...]
    out_ref[...] = o.astype(out_ref.dtype)                                  # lane-dense (block_b, C_pad)


@jax.jit
def text_classifier_forward(token_ids, emb_table, w1, b1, w2, b2):
    """token_ids: (B, S) int32; emb_table: (V, E) f32; w1: (E, H); b1: (H,);
       w2: (H, C); b2: (C,). Returns logits (B, C) float32."""
    B, S = token_ids.shape
    V, E = emb_table.shape
    H = w1.shape[1]
    C = w2.shape[1]

    # Lane-friendly padding: E, H -> multiple of 128 (clean K / N dims),
    # C -> at least 128 (unmasked lane-dense stores; sliced back at the end).
    E_pad = _round_up(E, 128)
    H_pad = _round_up(H, 128)
    C_pad = _round_up(max(C, 128), 128)

    emb_table_p = jnp.pad(emb_table, ((0, 0), (0, E_pad - E)))
    w1_p = jnp.pad(w1, ((0, E_pad - E), (0, H_pad - H)))
    b1_p = jnp.pad(b1, ((0, H_pad - H),)).reshape(1, H_pad)
    w2_p = jnp.pad(w2, ((0, H_pad - H), (0, C_pad - C)))
    b2_p = jnp.pad(b2, ((0, C_pad - C),)).reshape(1, C_pad)

    # Pad batch so it tiles cleanly in multiples of 8 sublanes; padded rows are sliced away.
    B_pad = _round_up(B, 8)
    ids = token_ids
    if B_pad != B:
        ids = jnp.pad(token_ids, ((0, B_pad - B), (0, 0)))

    # Embedding gather in plain JAX, streamed to the kernel as bf16.
    emb = jnp.take(emb_table_p.astype(jnp.bfloat16), ids, axis=0)           # (B_pad, S, E_pad) bf16

    block_b = _pick_block_b(B_pad)
    grid = (B_pad // block_b,)

    flops = 2 * B_pad * (E_pad * H_pad + H_pad * C_pad)
    bytes_accessed = (B_pad * S * E_pad * 2                                  # bf16 emb stream
                      + (E_pad * H_pad + H_pad * C_pad + H_pad + C_pad) * 4  # resident weights
                      + B_pad * C_pad * 4)                                   # logits out

    kernel = functools.partial(_classifier_kernel, inv_s=float(1.0 / S))

    out = pl.pallas_call(
        kernel,
        out_shape=jax.ShapeDtypeStruct((B_pad, C_pad), jnp.float32),
        grid_spec=pltpu.PrefetchScalarGridSpec(
            num_scalar_prefetch=0,
            grid=grid,
            in_specs=[
                pl.BlockSpec((block_b, S, E_pad), lambda i: (i, 0, 0)),
                pl.BlockSpec((E_pad, H_pad), lambda i: (0, 0)),   # weights: constant index_map
                pl.BlockSpec((1, H_pad), lambda i: (0, 0)),       #   -> stay resident in VMEM
                pl.BlockSpec((H_pad, C_pad), lambda i: (0, 0)),
                pl.BlockSpec((1, C_pad), lambda i: (0, 0)),
            ],
            out_specs=pl.BlockSpec((block_b, C_pad), lambda i: (i, 0)),
        ),
        compiler_params=pltpu.CompilerParams(
            dimension_semantics=("parallel",),
        ),
        cost_estimate=pl.CostEstimate(
            flops=flops, transcendentals=0, bytes_accessed=bytes_accessed),
    )(emb, w1_p, b1_p, w2_p, b2_p)

    return out[:B, :C]


def reference_forward(token_ids, emb_table, w1, b1, w2, b2):
    # Matches the kernel's numerics: bf16 embedding stream, f32 math afterwards.
    emb = jnp.take(emb_table.astype(jnp.bfloat16), token_ids, axis=0).astype(jnp.float32)
    x = jnp.mean(emb, axis=1)
    h = jnp.maximum(x @ w1 + b1, 0.0)
    return h @ w2 + b2


if __name__ == "__main__":
    # Small shapes consistent with the module's forward pass.
    vocab_size = 1000
    embed_size = 300
    hidden = 256
    num_classes = 5
    batch = 8
    seq = 16

    key = jax.random.PRNGKey(0)
    k_emb, k_w1, k_b1, k_w2, k_b2, k_ids = jax.random.split(key, 6)

    # Deterministic parameter init (synthetic; mirrors nn.Embedding / nn.Linear shapes).
    emb_table = jax.random.normal(k_emb, (vocab_size, embed_size), dtype=jnp.float32)
    # nn.Linear(embed_size, 256): weight (256, embed_size) stored transposed as (embed_size, 256)
    w1 = jax.random.normal(k_w1, (embed_size, hidden), dtype=jnp.float32) * 0.02
    b1 = jax.random.normal(k_b1, (hidden,), dtype=jnp.float32) * 0.02
    # nn.Linear(256, num_classes): weight stored transposed as (256, num_classes)
    w2 = jax.random.normal(k_w2, (hidden, num_classes), dtype=jnp.float32) * 0.02
    b2 = jax.random.normal(k_b2, (num_classes,), dtype=jnp.float32) * 0.02

    token_ids = jax.random.randint(k_ids, (batch, seq), 0, vocab_size, dtype=jnp.int32)

    out = text_classifier_forward(token_ids, emb_table, w1, b1, w2, b2)
    out = jax.block_until_ready(out)

    ref = reference_forward(token_ids, emb_table, w1, b1, w2, b2)
    assert out.shape == (batch, num_classes)
    assert jnp.allclose(out, ref, atol=1e-3, rtol=1e-3), "mismatch vs reference"

    print("KERNEL_OK")
</pallas_src>

<mosaic_0001>
module attributes {stable_mosaic.version = 11 : i64} {
  func.func @_classifier_kernel(%arg0: i32, %arg1: memref<8x16x384xbf16, #tpu.memory_space<vmem>>, %arg2: memref<384x256xf32, #tpu.memory_space<vmem>>, %arg3: memref<1x256xf32, #tpu.memory_space<vmem>>, %arg4: memref<256x128xf32, #tpu.memory_space<vmem>>, %arg5: memref<1x128xf32, #tpu.memory_space<vmem>>, %arg6: memref<8x128xf32, #tpu.memory_space<vmem>>) attributes {dimension_semantics = [#tpu.dimension_semantics<parallel>], iteration_bounds = array<i64: 1>, scalar_prefetch = 0 : i64, scratch_operands = 0 : i64, tpu.core_type = #tpu.core_type<tc>, window_params = [{transform_indices = @transform_0, window_bounds = array<i64: 8, 16, 384>}, {pipeline_mode = #tpu.pipeline_mode<synchronous>, transform_indices = @transform_1, window_bounds = array<i64: 384, 256>}, {pipeline_mode = #tpu.pipeline_mode<synchronous>, transform_indices = @transform_2, window_bounds = array<i64: 1, 256>}, {pipeline_mode = #tpu.pipeline_mode<synchronous>, transform_indices = @transform_3, window_bounds = array<i64: 256, 128>}, {pipeline_mode = #tpu.pipeline_mode<synchronous>, transform_indices = @transform_4, window_bounds = array<i64: 1, 128>}, {transform_indices = @transform_5, window_bounds = array<i64: 8, 128>}]} {
    %c0 = arith.constant 0 : index
    %c0_0 = arith.constant 0 : index
    %c0_1 = arith.constant 0 : index
    %0 = vector.load %arg1[%c0, %c0_0, %c0_1] : memref<8x16x384xbf16, #tpu.memory_space<vmem>>, vector<8x16x384xbf16>
    %1 = arith.extf %0 : vector<8x16x384xbf16> to vector<8x16x384xf32>
    %cst = arith.constant dense<0.000000e+00> : vector<8x384xf32>
    %2 = vector.multi_reduction <add>, %1, %cst [1] : vector<8x16x384xf32> to vector<8x384xf32>
    %cst_2 = arith.constant 6.250000e-02 : f32
    %3 = vector.broadcast %cst_2 : f32 to vector<8x384xf32>
    %4 = arith.mulf %2, %3 : vector<8x384xf32>
    %c0_3 = arith.constant 0 : index
    %c0_4 = arith.constant 0 : index
    %5 = vector.load %arg2[%c0_3, %c0_4] : memref<384x256xf32, #tpu.memory_space<vmem>>, vector<384x256xf32>
    %cst_5 = arith.constant dense<0.000000e+00> : vector<8x256xf32>
    %6 = tpu.matmul %4, %5, %cst_5 {dimension_numbers = #tpu.dot_dimension_numbers<[1], [0], [0], [1], [0, 0, 1, 1], [], []>} : vector<8x384xf32>, vector<384x256xf32>, vector<8x256xf32> -> vector<8x256xf32>
    %c0_6 = arith.constant 0 : index
    %c0_7 = arith.constant 0 : index
    %7 = vector.load %arg3[%c0_6, %c0_7] : memref<1x256xf32, #tpu.memory_space<vmem>>, vector<1x256xf32>
    %8 = vector.broadcast %7 : vector<1x256xf32> to vector<8x256xf32>
    %9 = arith.addf %6, %8 : vector<8x256xf32>
    %cst_8 = arith.constant 0.000000e+00 : f32
    %10 = vector.broadcast %cst_8 : f32 to vector<8x256xf32>
    %11 = arith.maximumf %9, %10 : vector<8x256xf32>
    %c0_9 = arith.constant 0 : index
    %c0_10 = arith.constant 0 : index
    %12 = vector.load %arg4[%c0_9, %c0_10] : memref<256x128xf32, #tpu.memory_space<vmem>>, vector<256x128xf32>
    %cst_11 = arith.constant dense<0.000000e+00> : vector<8x128xf32>
    %13 = tpu.matmul %11, %12, %cst_11 {dimension_numbers = #tpu.dot_dimension_numbers<[1], [0], [0], [1], [0, 0, 1, 1], [], []>} : vector<8x256xf32>, vector<256x128xf32>, vector<8x128xf32> -> vector<8x128xf32>
    %c0_12 = arith.constant 0 : index
    %c0_13 = arith.constant 0 : index
    %14 = vector.load %arg5[%c0_12, %c0_13] : memref<1x128xf32, #tpu.memory_space<vmem>>, vector<1x128xf32>
    %15 = vector.broadcast %14 : vector<1x128xf32> to vector<8x128xf32>
    %16 = arith.addf %13, %15 : vector<8x128xf32>
    %c0_14 = arith.constant 0 : index
    %c0_15 = arith.constant 0 : index
    %17 = vector.load %arg6[%c0_14, %c0_15] : memref<8x128xf32, #tpu.memory_space<vmem>>, vector<8x128xf32>
    tpu.vector_store %arg6[%c0_14, %c0_15], %16 {strides = array<i32>} : memref<8x128xf32, #tpu.memory_space<vmem>>, vector<8x128xf32>,
    return
  }
  func.func @transform_0(%arg0: i32) -> (i32, i32, i32) {
    %c0_i32 = arith.constant 0 : i32
    %c0_i32_0 = arith.constant 0 : i32
    %c0_i32_1 = arith.constant 0 : i32
    return %arg0, %c0_i32, %c0_i32_0 : i32, i32, i32
  }
  func.func @transform_1(%arg0: i32) -> (i32, i32) {
    %c0_i32 = arith.constant 0 : i32
    %c0_i32_0 = arith.constant 0 : i32
    %c0_i32_1 = arith.constant 0 : i32
    return %c0_i32, %c0_i32_0 : i32, i32
  }
  func.func @transform_2(%arg0: i32) -> (i32, i32) {
    %c0_i32 = arith.constant 0 : i32
    %c0_i32_0 = arith.constant 0 : i32
    %c0_i32_1 = arith.constant 0 : i32
    return %c0_i32, %c0_i32_0 : i32, i32
  }
  func.func @transform_3(%arg0: i32) -> (i32, i32) {
    %c0_i32 = arith.constant 0 : i32
    %c0_i32_0 = arith.constant 0 : i32
    %c0_i32_1 = arith.constant 0 : i32
    return %c0_i32, %c0_i32_0 : i32, i32
  }
  func.func @transform_4(%arg0: i32) -> (i32, i32) {
    %c0_i32 = arith.constant 0 : i32
    %c0_i32_0 = arith.constant 0 : i32
    %c0_i32_1 = arith.constant 0 : i32
    return %c0_i32, %c0_i32_0 : i32, i32
  }
  func.func @transform_5(%arg0: i32) -> (i32, i32) {
    %c0_i32 = arith.constant 0 : i32
    %c0_i32_0 = arith.constant 0 : i32
    return %arg0, %c0_i32 : i32, i32
  }
}

</mosaic_0001>

<llo_original>
// kernel: text_classifier_forward.1
$region0: #{text_classifier_forward.1}
  #allocation0 [shape = 'u32[]', space=smem, size = 0x4, offset = 0x4, fixed_abs, tag = 'smem constant byte address 0x4 - core index']
  #allocation1 [shape = 'u32[72,128]{1,0:T(1,128)}', space=vmem, size = 0x9000, scoped, tag = 'internal scratch']
  %s0 = inlined_call_operand.vmem [shape: bf16[8,16,384], index: 0, kind: input, shape index: {}]
  %s1 = inlined_call_operand.vmem [shape: f32[384,256], index: 1, kind: input, shape index: {}]
  %s2 = inlined_call_operand.vmem [shape: f32[1,256], index: 2, kind: input, shape index: {}]
  %s3 = inlined_call_operand.vmem [shape: f32[256,128], index: 3, kind: input, shape index: {}]
  %s4 = inlined_call_operand.vmem [shape: f32[1,128], index: 4, kind: input, shape index: {}]
  %s5 = inlined_call_operand.hbm [shape: f32[8,128], index: 5, kind: output, shape index: {}]
  %s6 = sld [smem:[#allocation0]]
  $region30: #{text_classifier_forward.1} parent=0
    _
  %s8 = ssub.s32 1, %s6
  %s9 = scalar_select 0, %s8, %s6
  $region1: #{text_classifier_forward.1} parent=0
    #allocation2 [shape = 'u8[4096]{0}', space=vmem, size = 0x1000, scoped, tag = 'output window, operand 0, single buffered']
    #allocation3 [shape = 's32[1]{0}', space=sflag, size = 0x4, scoped, tag = 'scoped memory for text_classifier_forward.1']
    %10 = vsyncpa [#allocation3], 0
    // Predicated region
    $region2: #{text_classifier_forward.1} parent=1 // pred_check
      _
    $region3: #{text_classifier_forward.1} parent=1 // pred_check_branch
      %12 = sbr.rel (0) target = $region5
    $region4: #{text_classifier_forward.1} parent=1 // pred_region
      _
    $region5: #{text_classifier_forward.1} parent=1 // pred_fallthru
      _
    // Predicated region
    $region6: #{text_classifier_forward.1} parent=1 // pred_check
      _
    $region7: #{text_classifier_forward.1} parent=1 // pred_check_branch
      %14 = sbr.rel (0) target = $region9
    $region8: #{text_classifier_forward.1} parent=1 // pred_region
      _
    $region9: #{text_classifier_forward.1} parent=1 // pred_fallthru
      _
    // Predicated region
    $region10: #{text_classifier_forward.1} parent=1 // pred_check
      _
    $region11: #{text_classifier_forward.1} parent=1 // pred_check_branch
      %16 = sbr.rel (0) target = $region13
    $region12: #{text_classifier_forward.1} parent=1 // pred_region
      _
    $region13: #{text_classifier_forward.1} parent=1 // pred_fallthru
      _
    // Predicated region
    $region14: #{text_classifier_forward.1} parent=1 // pred_check
      _
    $region15: #{text_classifier_forward.1} parent=1 // pred_check_branch
      %18 = sbr.rel (0) target = $region17
    $region16: #{text_classifier_forward.1} parent=1 // pred_region
      _
    $region17: #{text_classifier_forward.1} parent=1 // pred_fallthru
      _
    // Predicated region
    $region18: #{text_classifier_forward.1} parent=1 // pred_check
      _
    $region19: #{text_classifier_forward.1} parent=1 // pred_check_branch
      %20 = sbr.rel (0) target = $region21
    $region20: #{text_classifier_forward.1} parent=1 // pred_region
      _
    $region21: #{text_classifier_forward.1} parent=1 // pred_fallthru
      _
    %v21 = vld [vmem:[%s0] sm:$0xff]
    %v22 = vld [vmem:[%s0 + $0x8] sm:$0xf]
    %v23 = vld [vmem:[%s0 + $0xc] sm:$0xff]
    %v24 = vld [vmem:[%s0 + $0x14] sm:$0xf]
    %v25 = vld [vmem:[%s0 + $0x18] sm:$0xff]
    %v26 = vld [vmem:[%s0 + $0x20] sm:$0xf]
    %v27 = vld [vmem:[%s0 + $0x24] sm:$0xff]
    %v28 = vld [vmem:[%s0 + $0x2c] sm:$0xf]
    %v29 = vld [vmem:[%s0 + $0x30] sm:$0xff]
    %v30 = vld [vmem:[%s0 + $0x38] sm:$0xf]
    %v31 = vld [vmem:[%s0 + $0x3c] sm:$0xff]
    %v32 = vld [vmem:[%s0 + $0x44] sm:$0xf]
    %v33 = vld [vmem:[%s0 + $0x48] sm:$0xff]
    %v34 = vld [vmem:[%s0 + $0x50] sm:$0xf]
    %v35 = vld [vmem:[%s0 + $0x54] sm:$0xff]
    %v36 = vld [vmem:[%s0 + $0x5c] sm:$0xf]
    %v37 = vld [vmem:[%s0 + $0x60] sm:$0xff]
    %v38 = vld [vmem:[%s0 + $0x68] sm:$0xf]
    %v39 = vld [vmem:[%s0 + $0x6c] sm:$0xff]
    %v40 = vld [vmem:[%s0 + $0x74] sm:$0xf]
    %v41 = vld [vmem:[%s0 + $0x78] sm:$0xff]
    %v42 = vld [vmem:[%s0 + $0x80] sm:$0xf]
    %v43 = vld [vmem:[%s0 + $0x84] sm:$0xff]
    %v44 = vld [vmem:[%s0 + $0x8c] sm:$0xf]
    %v45 = vld [vmem:[%s0 + $0x90] sm:$0xff]
    %v46 = vld [vmem:[%s0 + $0x98] sm:$0xf]
    %v47 = vld [vmem:[%s0 + $0x9c] sm:$0xff]
    %v48 = vld [vmem:[%s0 + $0xa4] sm:$0xf]
    %v49 = vld [vmem:[%s0 + $0xa8] sm:$0xff]
    %v50 = vld [vmem:[%s0 + $0xb0] sm:$0xf]
    %v51 = vld [vmem:[%s0 + $0xb4] sm:$0xff]
    %v52 = vld [vmem:[%s0 + $0xbc] sm:$0xf]
    %v53 = vunpack.c.l.bf16 %v21
    %v54 = vunpack.c.h.bf16 %v21
    %v55 = vunpack.c.l.bf16 %v22
    %v56 = vunpack.c.l.bf16 %v23
    %v57 = vunpack.c.h.bf16 %v23
    %v58 = vunpack.c.l.bf16 %v24
    %v59 = vunpack.c.l.bf16 %v25
    %v60 = vunpack.c.h.bf16 %v25
    %v61 = vunpack.c.l.bf16 %v26
    %v62 = vunpack.c.l.bf16 %v27
    %v63 = vunpack.c.h.bf16 %v27
    %v64 = vunpack.c.l.bf16 %v28
    %v65 = vunpack.c.l.bf16 %v29
    %v66 = vunpack.c.h.bf16 %v29
    %v67 = vunpack.c.l.bf16 %v30
    %v68 = vunpack.c.l.bf16 %v31
    %v69 = vunpack.c.h.bf16 %v31
    %v70 = vunpack.c.l.bf16 %v32
    %v71 = vunpack.c.l.bf16 %v33
    %v72 = vunpack.c.h.bf16 %v33
    %v73 = vunpack.c.l.bf16 %v34
    %v74 = vunpack.c.l.bf16 %v35
    %v75 = vunpack.c.h.bf16 %v35
    %v76 = vunpack.c.l.bf16 %v36
    %v77 = vunpack.c.l.bf16 %v37
    %v78 = vunpack.c.h.bf16 %v37
    %v79 = vunpack.c.l.bf16 %v38
    %v80 = vunpack.c.l.bf16 %v39
    %v81 = vunpack.c.h.bf16 %v39
    %v82 = vunpack.c.l.bf16 %v40
    %v83 = vunpack.c.l.bf16 %v41
    %v84 = vunpack.c.h.bf16 %v41
    %v85 = vunpack.c.l.bf16 %v42
    %v86 = vunpack.c.l.bf16 %v43
    %v87 = vunpack.c.h.bf16 %v43
    %v88 = vunpack.c.l.bf16 %v44
    %v89 = vunpack.c.l.bf16 %v45
    %v90 = vunpack.c.h.bf16 %v45
    %v91 = vunpack.c.l.bf16 %v46
    %v92 = vunpack.c.l.bf16 %v47
    %v93 = vunpack.c.h.bf16 %v47
    %v94 = vunpack.c.l.bf16 %v48
    %v95 = vunpack.c.l.bf16 %v49
    %v96 = vunpack.c.h.bf16 %v49
    %v97 = vunpack.c.l.bf16 %v50
    %v98 = vunpack.c.l.bf16 %v51
    %v99 = vunpack.c.h.bf16 %v51
    %v100 = vunpack.c.l.bf16 %v52
    %v101 = vadd.f32 %v53, %v56
    %v102 = vrot.slane %v101, 4
    %v103 = vadd.f32 %v101, %v102
    %v104 = vrot.slane %v103, 2
    %v105 = vadd.f32 %v103, %v104
    %v106 = vrot.slane %v105, 1
    %v107 = vadd.f32 %v105, %v106
    %v108 = vadd.f32 %v54, %v57
    %v109 = vrot.slane %v108, 4
    %v110 = vadd.f32 %v108, %v109
    %v111 = vrot.slane %v110, 2
    %v112 = vadd.f32 %v110, %v111
    %v113 = vrot.slane %v112, 1
    %v114 = vadd.f32 %v112, %v113
    %v115 = vadd.f32 %v55, %v58
    %v116 = vrot.slane %v115, 4
    %v117 = vadd.f32 %v115, %v116
    %v118 = vrot.slane %v117, 2
    %v119 = vadd.f32 %v117, %v118
    %v120 = vrot.slane %v119, 1
    %v121 = vadd.f32 %v119, %v120
    %v122 = vadd.f32 %v59, %v62
    %v123 = vrot.slane %v122, 4
    %v124 = vadd.f32 %v122, %v123
    %v125 = vrot.slane %v124, 2
    %v126 = vadd.f32 %v124, %v125
    %v127 = vrot.slane %v126, 1
    %v128 = vadd.f32 %v126, %v127
    %v129 = vadd.f32 %v60, %v63
    %v130 = vrot.slane %v129, 4
    %v131 = vadd.f32 %v129, %v130
    %v132 = vrot.slane %v131, 2
    %v133 = vadd.f32 %v131, %v132
    %v134 = vrot.slane %v133, 1
    %v135 = vadd.f32 %v133, %v134
    %v136 = vadd.f32 %v61, %v64
    %v137 = vrot.slane %v136, 4
    %v138 = vadd.f32 %v136, %v137
    %v139 = vrot.slane %v138, 2
    %v140 = vadd.f32 %v138, %v139
    %v141 = vrot.slane %v140, 1
    %v142 = vadd.f32 %v140, %v141
    %v143 = vadd.f32 %v65, %v68
    %v144 = vrot.slane %v143, 4
    %v145 = vadd.f32 %v143, %v144
    %v146 = vrot.slane %v145, 2
    %v147 = vadd.f32 %v145, %v146
    %v148 = vrot.slane %v147, 1
    %v149 = vadd.f32 %v147, %v148
    %v150 = vadd.f32 %v66, %v69
    %v151 = vrot.slane %v150, 4
    %v152 = vadd.f32 %v150, %v151
    %v153 = vrot.slane %v152, 2
    %v154 = vadd.f32 %v152, %v153
    %v155 = vrot.slane %v154, 1
    %v156 = vadd.f32 %v154, %v155
    %v157 = vadd.f32 %v67, %v70
    %v158 = vrot.slane %v157, 4
    %v159 = vadd.f32 %v157, %v158
    %v160 = vrot.slane %v159, 2
    %v161 = vadd.f32 %v159, %v160
    %v162 = vrot.slane %v161, 1
    %v163 = vadd.f32 %v161, %v162
    %v164 = vadd.f32 %v71, %v74
    %v165 = vrot.slane %v164, 4
    %v166 = vadd.f32 %v164, %v165
    %v167 = vrot.slane %v166, 2
    %v168 = vadd.f32 %v166, %v167
    %v169 = vrot.slane %v168, 1
    %v170 = vadd.f32 %v168, %v169
    %v171 = vadd.f32 %v72, %v75
    %v172 = vrot.slane %v171, 4
    %v173 = vadd.f32 %v171, %v172
    %v174 = vrot.slane %v173, 2
    %v175 = vadd.f32 %v173, %v174
    %v176 = vrot.slane %v175, 1
    %v177 = vadd.f32 %v175, %v176
    %v178 = vadd.f32 %v73, %v76
    %v179 = vrot.slane %v178, 4
    %v180 = vadd.f32 %v178, %v179
    %v181 = vrot.slane %v180, 2
    %v182 = vadd.f32 %v180, %v181
    %v183 = vrot.slane %v182, 1
    %v184 = vadd.f32 %v182, %v183
    %v185 = vadd.f32 %v77, %v80
    %v186 = vrot.slane %v185, 4
    %v187 = vadd.f32 %v185, %v186
    %v188 = vrot.slane %v187, 2
    %v189 = vadd.f32 %v187, %v188
    %v190 = vrot.slane %v189, 1
    %v191 = vadd.f32 %v189, %v190
    %v192 = vadd.f32 %v78, %v81
    %v193 = vrot.slane %v192, 4
    %v194 = vadd.f32 %v192, %v193
    %v195 = vrot.slane %v194, 2
    %v196 = vadd.f32 %v194, %v195
    %v197 = vrot.slane %v196, 1
    %v198 = vadd.f32 %v196, %v197
    %v199 = vadd.f32 %v79, %v82
    %v200 = vrot.slane %v199, 4
    %v201 = vadd.f32 %v199, %v200
    %v202 = vrot.slane %v201, 2
    %v203 = vadd.f32 %v201, %v202
    %v204 = vrot.slane %v203, 1
    %v205 = vadd.f32 %v203, %v204
    %v206 = vadd.f32 %v83, %v86
    %v207 = vrot.slane %v206, 4
    %v208 = vadd.f32 %v206, %v207
    %v209 = vrot.slane %v208, 2
    %v210 = vadd.f32 %v208, %v209
    %v211 = vrot.slane %v210, 1
    %v212 = vadd.f32 %v210, %v211
    %v213 = vadd.f32 %v84, %v87
    %v214 = vrot.slane %v213, 4
    %v215 = vadd.f32 %v213, %v214
    %v216 = vrot.slane %v215, 2
    %v217 = vadd.f32 %v215, %v216
    %v218 = vrot.slane %v217, 1
    %v219 = vadd.f32 %v217, %v218
    %v220 = vadd.f32 %v85, %v88
    %v221 = vrot.slane %v220, 4
    %v222 = vadd.f32 %v220, %v221
    %v223 = vrot.slane %v222, 2
    %v224 = vadd.f32 %v222, %v223
    %v225 = vrot.slane %v224, 1
    %v226 = vadd.f32 %v224, %v225
    %v227 = vadd.f32 %v89, %v92
    %v228 = vrot.slane %v227, 4
    %v229 = vadd.f32 %v227, %v228
    %v230 = vrot.slane %v229, 2
    %v231 = vadd.f32 %v229, %v230
    %v232 = vrot.slane %v231, 1
    %v233 = vadd.f32 %v231, %v232
    %v234 = vadd.f32 %v90, %v93
    %v235 = vrot.slane %v234, 4
    %v236 = vadd.f32 %v234, %v235
    %v237 = vrot.slane %v236, 2
    %v238 = vadd.f32 %v236, %v237
    %v239 = vrot.slane %v238, 1
    %v240 = vadd.f32 %v238, %v239
    %v241 = vadd.f32 %v91, %v94
    %v242 = vrot.slane %v241, 4
    %v243 = vadd.f32 %v241, %v242
    %v244 = vrot.slane %v243, 2
    %v245 = vadd.f32 %v243, %v244
    %v246 = vrot.slane %v245, 1
    %v247 = vadd.f32 %v245, %v246
    %v248 = vadd.f32 %v95, %v98
    %v249 = vrot.slane %v248, 4
    %v250 = vadd.f32 %v248, %v249
    %v251 = vrot.slane %v250, 2
    %v252 = vadd.f32 %v250, %v251
    %v253 = vrot.slane %v252, 1
    %v254 = vadd.f32 %v252, %v253
    %v255 = vadd.f32 %v96, %v99
    %v256 = vrot.slane %v255, 4
    %v257 = vadd.f32 %v255, %v256
    %v258 = vrot.slane %v257, 2
    %v259 = vadd.f32 %v257, %v258
    %v260 = vrot.slane %v259, 1
    %v261 = vadd.f32 %v259, %v260
    %v262 = vadd.f32 %v97, %v100
    %v263 = vrot.slane %v262, 4
    %v264 = vadd.f32 %v262, %v263
    %v265 = vrot.slane %v264, 2
    %v266 = vadd.f32 %v264, %v265
    %v267 = vrot.slane %v266, 1
    %v268 = vadd.f32 %v266, %v267
    %v269 = vmul.f32 %v107, 0.0625
    %v270 = vmul.f32 %v114, 0.0625
    %v271 = vmul.f32 %v121, 0.0625
    %v272 = vmul.f32 %v128, 0.0625
    %v273 = vmul.f32 %v135, 0.0625
    %v274 = vmul.f32 %v142, 0.0625
    %v275 = vmul.f32 %v149, 0.0625
    %v276 = vmul.f32 %v156, 0.0625
    %v277 = vmul.f32 %v163, 0.0625
    %v278 = vmul.f32 %v170, 0.0625
    %v279 = vmul.f32 %v177, 0.0625
    %v280 = vmul.f32 %v184, 0.0625
    %v281 = vmul.f32 %v191, 0.0625
    %v282 = vmul.f32 %v198, 0.0625
    %v283 = vmul.f32 %v205, 0.0625
    %v284 = vmul.f32 %v212, 0.0625
    %v285 = vmul.f32 %v219, 0.0625
    %v286 = vmul.f32 %v226, 0.0625
    %v287 = vmul.f32 %v233, 0.0625
    %v288 = vmul.f32 %v240, 0.0625
    %v289 = vmul.f32 %v247, 0.0625
    %v290 = vmul.f32 %v254, 0.0625
    %v291 = vmul.f32 %v261, 0.0625
    %v292 = vmul.f32 %v268, 0.0625
    %v293 = vld [vmem:[%s1] sm:$0xff]
    %v294 = vld [vmem:[%s1 + $0x8] sm:$0xff]
    %v295 = vld [vmem:[%s1 + $0x10] sm:$0xff]
    %v296 = vld [vmem:[%s1 + $0x18] sm:$0xff]
    %v297 = vld [vmem:[%s1 + $0x20] sm:$0xff]
    %v298 = vld [vmem:[%s1 + $0x28] sm:$0xff]
    %v299 = vld [vmem:[%s1 + $0x30] sm:$0xff]
    %v300 = vld [vmem:[%s1 + $0x38] sm:$0xff]
    %v301 = vld [vmem:[%s1 + $0x40] sm:$0xff]
    %v302 = vld [vmem:[%s1 + $0x48] sm:$0xff]
    %v303 = vld [vmem:[%s1 + $0x50] sm:$0xff]
    %v304 = vld [vmem:[%s1 + $0x58] sm:$0xff]
    %v305 = vld [vmem:[%s1 + $0x60] sm:$0xff]
    %v306 = vld [vmem:[%s1 + $0x68] sm:$0xff]
    %v307 = vld [vmem:[%s1 + $0x70] sm:$0xff]
    %v308 = vld [vmem:[%s1 + $0x78] sm:$0xff]
    %v309 = vld [vmem:[%s1 + $0x80] sm:$0xff]
    %v310 = vld [vmem:[%s1 + $0x88] sm:$0xff]
    %v311 = vld [vmem:[%s1 + $0x90] sm:$0xff]
    %v312 = vld [vmem:[%s1 + $0x98] sm:$0xff]
    %v313 = vld [vmem:[%s1 + $0xa0] sm:$0xff]
    %v314 = vld [vmem:[%s1 + $0xa8] sm:$0xff]
    %v315 = vld [vmem:[%s1 + $0xb0] sm:$0xff]
    %v316 = vld [vmem:[%s1 + $0xb8] sm:$0xff]
    %v317 = vld [vmem:[%s1 + $0xc0] sm:$0xff]
    %v318 = vld [vmem:[%s1 + $0xc8] sm:$0xff]
    %v319 = vld [vmem:[%s1 + $0xd0] sm:$0xff]
    %v320 = vld [vmem:[%s1 + $0xd8] sm:$0xff]
    %v321 = vld [vmem:[%s1 + $0xe0] sm:$0xff]
    %v322 = vld [vmem:[%s1 + $0xe8] sm:$0xff]
    %v323 = vld [vmem:[%s1 + $0xf0] sm:$0xff]
    %v324 = vld [vmem:[%s1 + $0xf8] sm:$0xff]
    %v325 = vld [vmem:[%s1 + $0x100] sm:$0xff]
    %v326 = vld [vmem:[%s1 + $0x108] sm:$0xff]
    %v327 = vld [vmem:[%s1 + $0x110] sm:$0xff]
    %v328 = vld [vmem:[%s1 + $0x118] sm:$0xff]
    %v329 = vld [vmem:[%s1 + $0x120] sm:$0xff]
    %v330 = vld [vmem:[%s1 + $0x128] sm:$0xff]
    %v331 = vld [vmem:[%s1 + $0x130] sm:$0xff]
    %v332 = vld [vmem:[%s1 + $0x138] sm:$0xff]
    %v333 = vld [vmem:[%s1 + $0x140] sm:$0xff]
    %v334 = vld [vmem:[%s1 + $0x148] sm:$0xff]
    %v335 = vld [vmem:[%s1 + $0x150] sm:$0xff]
    %v336 = vld [vmem:[%s1 + $0x158] sm:$0xff]
    %v337 = vld [vmem:[%s1 + $0x160] sm:$0xff]
    %v338 = vld [vmem:[%s1 + $0x168] sm:$0xff]
    %v339 = vld [vmem:[%s1 + $0x170] sm:$0xff]
    %v340 = vld [vmem:[%s1 + $0x178] sm:$0xff]
    %v341 = vld [vmem:[%s1 + $0x180] sm:$0xff]
    %v342 = vld [vmem:[%s1 + $0x188] sm:$0xff]
    %v343 = vld [vmem:[%s1 + $0x190] sm:$0xff]
    %v344 = vld [vmem:[%s1 + $0x198] sm:$0xff]
    %v345 = vld [vmem:[%s1 + $0x1a0] sm:$0xff]
    %v346 = vld [vmem:[%s1 + $0x1a8] sm:$0xff]
    %v347 = vld [vmem:[%s1 + $0x1b0] sm:$0xff]
    %v348 = vld [vmem:[%s1 + $0x1b8] sm:$0xff]
    %v349 = vld [vmem:[%s1 + $0x1c0] sm:$0xff]
    %v350 = vld [vmem:[%s1 + $0x1c8] sm:$0xff]
    %v351 = vld [vmem:[%s1 + $0x1d0] sm:$0xff]
    %v352 = vld [vmem:[%s1 + $0x1d8] sm:$0xff]
    %v353 = vld [vmem:[%s1 + $0x1e0] sm:$0xff]
    %v354 = vld [vmem:[%s1 + $0x1e8] sm:$0xff]
    %v355 = vld [vmem:[%s1 + $0x1f0] sm:$0xff]
    %v356 = vld [vmem:[%s1 + $0x1f8] sm:$0xff]
    %v357 = vld [vmem:[%s1 + $0x200] sm:$0xff]
    %v358 = vld [vmem:[%s1 + $0x208] sm:$0xff]
    %v359 = vld [vmem:[%s1 + $0x210] sm:$0xff]
    %v360 = vld [vmem:[%s1 + $0x218] sm:$0xff]
    %v361 = vld [vmem:[%s1 + $0x220] sm:$0xff]
    %v362 = vld [vmem:[%s1 + $0x228] sm:$0xff]
    %v363 = vld [vmem:[%s1 + $0x230] sm:$0xff]
    %v364 = vld [vmem:[%s1 + $0x238] sm:$0xff]
    %v365 = vld [vmem:[%s1 + $0x240] sm:$0xff]
    %v366 = vld [vmem:[%s1 + $0x248] sm:$0xff]
    %v367 = vld [vmem:[%s1 + $0x250] sm:$0xff]
    %v368 = vld [vmem:[%s1 + $0x258] sm:$0xff]
    %v369 = vld [vmem:[%s1 + $0x260] sm:$0xff]
    %v370 = vld [vmem:[%s1 + $0x268] sm:$0xff]
    %v371 = vld [vmem:[%s1 + $0x270] sm:$0xff]
    %v372 = vld [vmem:[%s1 + $0x278] sm:$0xff]
    %v373 = vld [vmem:[%s1 + $0x280] sm:$0xff]
    %v374 = vld [vmem:[%s1 + $0x288] sm:$0xff]
    %v375 = vld [vmem:[%s1 + $0x290] sm:$0xff]
    %v376 = vld [vmem:[%s1 + $0x298] sm:$0xff]
    %v377 = vld [vmem:[%s1 + $0x2a0] sm:$0xff]
    %v378 = vld [vmem:[%s1 + $0x2a8] sm:$0xff]
    %v379 = vld [vmem:[%s1 + $0x2b0] sm:$0xff]
    %v380 = vld [vmem:[%s1 + $0x2b8] sm:$0xff]
    %v381 = vld [vmem:[%s1 + $0x2c0] sm:$0xff]
    %v382 = vld [vmem:[%s1 + $0x2c8] sm:$0xff]
    %v383 = vld [vmem:[%s1 + $0x2d0] sm:$0xff]
    %v384 = vld [vmem:[%s1 + $0x2d8] sm:$0xff]
    %v385 = vld [vmem:[%s1 + $0x2e0] sm:$0xff]
    %v386 = vld [vmem:[%s1 + $0x2e8] sm:$0xff]
    %v387 = vld [vmem:[%s1 + $0x2f0] sm:$0xff]
    %v388 = vld [vmem:[%s1 + $0x2f8] sm:$0xff]
    %v389 = vld [vmem:[%s2] sm:$0x3]
    %v391 = vperm.slane %v389, 0
    %v392 = vperm.slane %v389, 1
    %vm419 = vcmask 1041409
    %v420 = vsel %vm419, %v272, %v269
    %vm421 = vcmask 1042434
    %v422 = vsel %vm421, %v275, %v420
    %vm423 = vcmask 1043459
    %v424 = vsel %vm423, %v278, %v422
    %vm425 = vcmask 1044484
    %v426 = vsel %vm425, %v281, %v424
    %vm427 = vcmask 1045509
    %v428 = vsel %vm427, %v284, %v426
    %vm429 = vcmask 1046534
    %v430 = vsel %vm429, %v287, %v428
    %vm431 = vcmask 1047559
    %v432 = vsel %vm431, %v290, %v430
    %v433 = vsel %vm419, %v273, %v270
    %v434 = vsel %vm421, %v276, %v433
    %v435 = vsel %vm423, %v279, %v434
    %v436 = vsel %vm425, %v282, %v435
    %v437 = vsel %vm427, %v285, %v436
    %v438 = vsel %vm429, %v288, %v437
    %v439 = vsel %vm431, %v291, %v438
    %v440 = vsel %vm419, %v274, %v271
    %v441 = vsel %vm421, %v277, %v440
    %v442 = vsel %vm423, %v280, %v441
    %v443 = vsel %vm425, %v283, %v442
    %v444 = vsel %vm427, %v286, %v443
    %v445 = vsel %vm429, %v289, %v444
    %v446 = vsel %vm431, %v292, %v445
    %450 = vmatpush.msra.mxu0 %v323
    %451 = vmatpush.msra.mxu0 %v321
    %452 = vmatpush.msra.mxu0 %v319
    %453 = vmatpush.msra.mxu0 %v317
    %454 = vmatpush.msra.mxu0 %v315
    %455 = vmatpush.msra.mxu0 %v313
    %456 = vmatpush.msra.mxu0 %v311
    %457 = vmatpush.msra.mxu0 %v309
    %458 = vmatpush.msra.mxu0 %v307
    %459 = vmatpush.msra.mxu0 %v305
    %460 = vmatpush.msra.mxu0 %v303
    %461 = vmatpush.msra.mxu0 %v301
    %462 = vmatpush.msra.mxu0 %v299
    %463 = vmatpush.msra.mxu0 %v297
    %464 = vmatpush.msra.mxu0 %v295
    %465 = vmatpush.msra.mxu0 %v293
    %466 = vmatmul.f32.gmra.mxu0 %v432
    %v467 = vpop.f32.mrf.mxu0
    %v468 = vadd.f32 %v391, %v467
    %469 = vdwg.mxu0
    %470 = vmatpush.msra.mxu0 %v355
    %471 = vmatpush.msra.mxu0 %v353
    %472 = vmatpush.msra.mxu0 %v351
    %473 = vmatpush.msra.mxu0 %v349
    %474 = vmatpush.msra.mxu0 %v347
    %475 = vmatpush.msra.mxu0 %v345
    %476 = vmatpush.msra.mxu0 %v343
    %477 = vmatpush.msra.mxu0 %v341
    %478 = vmatpush.msra.mxu0 %v339
    %479 = vmatpush.msra.mxu0 %v337
    %480 = vmatpush.msra.mxu0 %v335
    %481 = vmatpush.msra.mxu0 %v333
    %482 = vmatpush.msra.mxu0 %v331
    %483 = vmatpush.msra.mxu0 %v329
    %484 = vmatpush.msra.mxu0 %v327
    %485 = vmatpush.msra.mxu0 %v325
    %486 = vmatmul.f32.gmra.mxu0 %v439
    %v487 = vpop.f32.mrf.mxu0
    %v488 = vadd.f32 %v468, %v487
    %489 = vdwg.mxu0
    %490 = vmatpush.msra.mxu0 %v387
    %491 = vmatpush.msra.mxu0 %v385
    %492 = vmatpush.msra.mxu0 %v383
    %493 = vmatpush.msra.mxu0 %v381
    %494 = vmatpush.msra.mxu0 %v379
    %495 = vmatpush.msra.mxu0 %v377
    %496 = vmatpush.msra.mxu0 %v375
    %497 = vmatpush.msra.mxu0 %v373
    %498 = vmatpush.msra.mxu0 %v371
    %499 = vmatpush.msra.mxu0 %v369
    %500 = vmatpush.msra.mxu0 %v367
    %501 = vmatpush.msra.mxu0 %v365
    %502 = vmatpush.msra.mxu0 %v363
    %503 = vmatpush.msra.mxu0 %v361
    %504 = vmatpush.msra.mxu0 %v359
    %505 = vmatpush.msra.mxu0 %v357
    %506 = vmatmul.f32.gmra.mxu0 %v446
    %v507 = vpop.f32.mrf.mxu0
    %v508 = vadd.f32 %v488, %v507
    %509 = vdwg.mxu0
    %510 = vmatpush.msra.mxu0 %v324
    %511 = vmatpush.msra.mxu0 %v322
    %512 = vmatpush.msra.mxu0 %v320
    %513 = vmatpush.msra.mxu0 %v318
    %514 = vmatpush.msra.mxu0 %v316
    %515 = vmatpush.msra.mxu0 %v314
    %516 = vmatpush.msra.mxu0 %v312
    %517 = vmatpush.msra.mxu0 %v310
    %518 = vmatpush.msra.mxu0 %v308
    %519 = vmatpush.msra.mxu0 %v306
    %520 = vmatpush.msra.mxu0 %v304
    %521 = vmatpush.msra.mxu0 %v302
    %522 = vmatpush.msra.mxu0 %v300
    %523 = vmatpush.msra.mxu0 %v298
    %524 = vmatpush.msra.mxu0 %v296
    %525 = vmatpush.msra.mxu0 %v294
    %526 = vmatmul.f32.gmra.mxu0 %v432
    %v527 = vpop.f32.mrf.mxu0
    %v528 = vadd.f32 %v392, %v527
    %529 = vdwg.mxu0
    %530 = vmatpush.msra.mxu0 %v356
    %531 = vmatpush.msra.mxu0 %v354
    %532 = vmatpush.msra.mxu0 %v352
    %533 = vmatpush.msra.mxu0 %v350
    %534 = vmatpush.msra.mxu0 %v348
    %535 = vmatpush.msra.mxu0 %v346
    %536 = vmatpush.msra.mxu0 %v344
    %537 = vmatpush.msra.mxu0 %v342
    %538 = vmatpush.msra.mxu0 %v340
    %539 = vmatpush.msra.mxu0 %v338
    %540 = vmatpush.msra.mxu0 %v336
    %541 = vmatpush.msra.mxu0 %v334
    %542 = vmatpush.msra.mxu0 %v332
    %543 = vmatpush.msra.mxu0 %v330
    %544 = vmatpush.msra.mxu0 %v328
    %545 = vmatpush.msra.mxu0 %v326
    %546 = vmatmul.f32.gmra.mxu0 %v439
    %v547 = vpop.f32.mrf.mxu0
    %v548 = vadd.f32 %v528, %v547
    %549 = vdwg.mxu0
    %550 = vmatpush.msra.mxu0 %v388
    %551 = vmatpush.msra.mxu0 %v386
    %552 = vmatpush.msra.mxu0 %v384
    %553 = vmatpush.msra.mxu0 %v382
    %554 = vmatpush.msra.mxu0 %v380
    %555 = vmatpush.msra.mxu0 %v378
    %556 = vmatpush.msra.mxu0 %v376
    %557 = vmatpush.msra.mxu0 %v374
    %558 = vmatpush.msra.mxu0 %v372
    %559 = vmatpush.msra.mxu0 %v370
    %560 = vmatpush.msra.mxu0 %v368
    %561 = vmatpush.msra.mxu0 %v366
    %562 = vmatpush.msra.mxu0 %v364
    %563 = vmatpush.msra.mxu0 %v362
    %564 = vmatpush.msra.mxu0 %v360
    %565 = vmatpush.msra.mxu0 %v358
    %566 = vmatmul.f32.gmra.mxu0 %v446
    %v567 = vpop.f32.mrf.mxu0
    %v568 = vadd.f32 %v548, %v567
    %569 = vdwg.mxu0
    %v570 = vmax.f32 %v508, 0.0
    %v571 = vmax.f32 %v568, 0.0
    %v572 = vld [vmem:[%s3] sm:$0xff]
    %v573 = vld [vmem:[%s3 + $0x8] sm:$0xff]
    %v574 = vld [vmem:[%s3 + $0x10] sm:$0xff]
    %v575 = vld [vmem:[%s3 + $0x18] sm:$0xff]
    %v576 = vld [vmem:[%s3 + $0x20] sm:$0xff]
    %v577 = vld [vmem:[%s3 + $0x28] sm:$0xff]
    %v578 = vld [vmem:[%s3 + $0x30] sm:$0xff]
    %v579 = vld [vmem:[%s3 + $0x38] sm:$0xff]
    %v580 = vld [vmem:[%s3 + $0x40] sm:$0xff]
    %v581 = vld [vmem:[%s3 + $0x48] sm:$0xff]
    %v582 = vld [vmem:[%s3 + $0x50] sm:$0xff]
    %v583 = vld [vmem:[%s3 + $0x58] sm:$0xff]
    %v584 = vld [vmem:[%s3 + $0x60] sm:$0xff]
    %v585 = vld [vmem:[%s3 + $0x68] sm:$0xff]
    %v586 = vld [vmem:[%s3 + $0x70] sm:$0xff]
    %v587 = vld [vmem:[%s3 + $0x78] sm:$0xff]
    %v588 = vld [vmem:[%s3 + $0x80] sm:$0xff]
    %v589 = vld [vmem:[%s3 + $0x88] sm:$0xff]
    %v590 = vld [vmem:[%s3 + $0x90] sm:$0xff]
    %v591 = vld [vmem:[%s3 + $0x98] sm:$0xff]
    %v592 = vld [vmem:[%s3 + $0xa0] sm:$0xff]
    %v593 = vld [vmem:[%s3 + $0xa8] sm:$0xff]
    %v594 = vld [vmem:[%s3 + $0xb0] sm:$0xff]
    %v595 = vld [vmem:[%s3 + $0xb8] sm:$0xff]
    %v596 = vld [vmem:[%s3 + $0xc0] sm:$0xff]
    %v597 = vld [vmem:[%s3 + $0xc8] sm:$0xff]
    %v598 = vld [vmem:[%s3 + $0xd0] sm:$0xff]
    %v599 = vld [vmem:[%s3 + $0xd8] sm:$0xff]
    %v600 = vld [vmem:[%s3 + $0xe0] sm:$0xff]
    %v601 = vld [vmem:[%s3 + $0xe8] sm:$0xff]
    %v602 = vld [vmem:[%s3 + $0xf0] sm:$0xff]
    %v603 = vld [vmem:[%s3 + $0xf8] sm:$0xff]
    %v604 = vld [vmem:[%s4] sm:$0x1]
    %v606 = vperm.slane %v604, 0
    %608 = vmatpush.msra.mxu0 %v587
    %609 = vmatpush.msra.mxu0 %v586
    %610 = vmatpush.msra.mxu0 %v585
    %611 = vmatpush.msra.mxu0 %v584
    %612 = vmatpush.msra.mxu0 %v583
    %613 = vmatpush.msra.mxu0 %v582
    %614 = vmatpush.msra.mxu0 %v581
    %615 = vmatpush.msra.mxu0 %v580
    %616 = vmatpush.msra.mxu0 %v579
    %617 = vmatpush.msra.mxu0 %v578
    %618 = vmatpush.msra.mxu0 %v577
    %619 = vmatpush.msra.mxu0 %v576
    %620 = vmatpush.msra.mxu0 %v575
    %621 = vmatpush.msra.mxu0 %v574
    %622 = vmatpush.msra.mxu0 %v573
    %623 = vmatpush.msra.mxu0 %v572
    %624 = vmatmul.f32.gmra.mxu0 %v570
    %v625 = vpop.f32.mrf.mxu0
    %v626 = vadd.f32 %v606, %v625
    %627 = vdwg.mxu0
    %628 = vmatpush.msra.mxu0 %v603
    %629 = vmatpush.msra.mxu0 %v602
    %630 = vmatpush.msra.mxu0 %v601
    %631 = vmatpush.msra.mxu0 %v600
    %632 = vmatpush.msra.mxu0 %v599
    %633 = vmatpush.msra.mxu0 %v598
    %634 = vmatpush.msra.mxu0 %v597
    %635 = vmatpush.msra.mxu0 %v596
    %636 = vmatpush.msra.mxu0 %v595
    %637 = vmatpush.msra.mxu0 %v594
    %638 = vmatpush.msra.mxu0 %v593
    %639 = vmatpush.msra.mxu0 %v592
    %640 = vmatpush.msra.mxu0 %v591
    %641 = vmatpush.msra.mxu0 %v590
    %642 = vmatpush.msra.mxu0 %v589
    %643 = vmatpush.msra.mxu0 %v588
    %644 = vmatmul.f32.gmra.mxu0 %v571
    %v645 = vpop.f32.mrf.mxu0
    %v646 = vadd.f32 %v626, %v645
    %647 = vdwg.mxu0
    %648 = vst [vmem:[#allocation2] sm:$0xff] %v646
    // Predicated region
    $region22: #{text_classifier_forward.1} parent=1 // pred_check
      _
    $region23: #{text_classifier_forward.1} parent=1 // pred_check_branch
      %650 = sbr.rel (0) target = $region25
    $region24: #{text_classifier_forward.1} parent=1 // pred_region
      %652 = vsyncadd [#allocation3], 0
      %s654 = sshll.u32 [#allocation2], 4
      %s655 = int_to_ptr.vmem [resolvable:$true] %s654
      %s656 = sshll.u32 %s5, 4
      %s657 = int_to_ptr.hbm [resolvable:$true] %s656
      %659 = dma.vmem_to_hbm [thread:$0]  %s655, 128, %s657, [#allocation3]
    $region25: #{text_classifier_forward.1} parent=1 // pred_fallthru
      _
    // Predicated region
    $region26: #{text_classifier_forward.1} parent=1 // pred_check
      _
    $region27: #{text_classifier_forward.1} parent=1 // pred_check_branch
      %661 = sbr.rel (0) target = $region29
    $region28: #{text_classifier_forward.1} parent=1 // pred_region
      %663 = dma.done [#allocation3], 128
    $region29: #{text_classifier_forward.1} parent=1 // pred_fallthru
      _
    %664 = vsyncpa [#allocation3], 1

</llo_original>
